<compile_context>
chip_gen: v7x
topology: tpu7x:2x2x1
jax: 0.10.0
libtpu: 0.0.40
codegen_flags: <defaults>
</compile_context>

<pallas_src>
import functools

import numpy as np
import jax
import jax.numpy as jnp
from jax.experimental import pallas as pl
from jax.experimental.pallas import tpu as pltpu

EXTREME = 100.0  # matches torch.FloatTensor([100.0]) upper clamp


def coupling_kernel(u_ref,
                    wa1_ref, ba1_ref, wa2_ref, ba2_ref,
                    wb1_ref, bb1_ref, wb2_ref, bb2_ref,
                    out_ref):
    """One (TB, C) batch tile.

    Columns are in the ORIGINAL channel order; the permutation is pre-folded
    into the weights.  Columns perm[:c] carry the u1 -> v1 path, columns
    perm[c:] carry the u2 -> v2 path; each phase is an identity on the
    complementary columns (its scattered s/t outputs are exactly zero there).
    """
    C = u_ref.shape[1]
    mm_dt = wa1_ref.dtype                       # bf16 (default) or f32

    x = u_ref[...]                              # (TB, C) f32

    # ---- phase A: [S2 | T2](u2), writes v1 into columns perm[:c] ------------
    ha = jnp.maximum(
        jnp.dot(x.astype(mm_dt), wa1_ref[...],
                preferred_element_type=jnp.float32) + ba1_ref[...], 0.0)
    st_a = jnp.dot(ha.astype(mm_dt), wa2_ref[...],
                   preferred_element_type=jnp.float32) + ba2_ref[...]
    s_a = st_a[:, :C]                           # S2(u2) scattered, 0 elsewhere
    t_a = st_a[:, C:]                           # T2(u2) scattered, 0 elsewhere
    mid = x * jnp.exp(jnp.minimum(s_a, EXTREME)) + t_a   # = [v1 | u2] scattered

    # ---- phase B: [S1 | T1](v1), writes v2 into columns perm[c:] ------------
    hb = jnp.maximum(
        jnp.dot(mid.astype(mm_dt), wb1_ref[...],
                preferred_element_type=jnp.float32) + bb1_ref[...], 0.0)
    st_b = jnp.dot(hb.astype(mm_dt), wb2_ref[...],
                   preferred_element_type=jnp.float32) + bb2_ref[...]
    s_b = st_b[:, :C]
    t_b = st_b[:, C:]
    out_ref[...] = mid * jnp.exp(jnp.minimum(s_b, EXTREME)) + t_b


def _fold_phase(p_s, p_t, in_cols, out_cols, C, mxu_dtype):
    """Fuse one (S, T) pair of Linear-ReLU-Linear nets (sharing an input) and
    fold the channel permutation into the weights.

        h        = relu(x @ W1 + b1)    W1: (C, 2H), rows in_cols <- [sw1 | tw1]
        [s | t]  = h @ W2 + b2          W2: (2H, 2C), cols out_cols <- sw2 / tw2
    s/t are zero on the complementary columns -> identity pass-through there.
    """
    sw1, sb1, sw2, sb2 = [np.asarray(a, np.float32) for a in p_s]
    tw1, tb1, tw2, tb2 = [np.asarray(a, np.float32) for a in p_t]
    H = sw1.shape[1]

    w1 = np.zeros((C, 2 * H), np.float32)
    w1[in_cols, :H] = sw1
    w1[in_cols, H:] = tw1
    b1 = np.concatenate([sb1.reshape(1, H), tb1.reshape(1, H)], axis=1)

    w2 = np.zeros((2 * H, 2 * C), np.float32)
    w2[:H, out_cols] = sw2
    w2[H:, C + out_cols] = tw2
    b2 = np.zeros((1, 2 * C), np.float32)
    b2[0, out_cols] = sb2.reshape(-1)
    b2[0, C + out_cols] = tb2.reshape(-1)

    return (jnp.asarray(w1, mxu_dtype), jnp.asarray(b1, jnp.float32),
            jnp.asarray(w2, mxu_dtype), jnp.asarray(b2, jnp.float32))


def prepare_invertible_block(params, perm, *, mxu_dtype=jnp.bfloat16):
    """One-time, host-side weight fusion + permutation folding.

    params: dict "S1","T1","S2","T2" -> (w1 (c,H), b1 (1,H), w2 (H,c), b2 (1,c))
    perm:   [C] channel permutation (self.perm)
    Returns the 8 tensors the kernel consumes.
    """
    perm = np.asarray(perm)
    C = perm.shape[0]
    c = C // 2
    p1, p2 = perm[:c], perm[c:]
    # phase A: S2/T2 read u2 = u[:, perm[c:]], write v1 into columns perm[:c]
    wa1, ba1, wa2, ba2 = _fold_phase(params["S2"], params["T2"], p2, p1, C, mxu_dtype)
    # phase B: S1/T1 read v1 (columns perm[:c]), write v2 into columns perm[c:]
    wb1, bb1, wb2, bb2 = _fold_phase(params["S1"], params["T1"], p1, p2, C, mxu_dtype)
    return (wa1, ba1, wa2, ba2, wb1, bb1, wb2, bb2)


def _round_up(x, m):
    return ((x + m - 1) // m) * m


@functools.partial(jax.jit, static_argnames=("tb",))
def invertible_block_forward(u, prepared, *, tb=2048):
    """Forward pass of InvertibleBlock.

    u:        [batch, channels] float32
    prepared: output of prepare_invertible_block (built once)
    tb:       max batch tile size (rows per grid step)
    """
    B, C = u.shape
    weights = prepared
    H = weights[0].shape[1] // 2

    # Batch tile: as large as `tb` allows (amortizes per-step overhead, long
    # contiguous DMAs), sublane-aligned, but capped so the grid keeps >= 2
    # "parallel" steps when B allows (v7x has 2 TensorCores).
    TB = min(tb, _round_up(B, 8))
    if B > 8:
        TB = min(TB, max(8, _round_up(pl.cdiv(B, 2), 8)))
    if B < 8:
        TB = B                                   # block == full dim edge case
    grid = (pl.cdiv(B, TB),)                     # ragged tail masked by Pallas

    data_spec = pl.BlockSpec((TB, C), lambda i: (i, 0))
    # weights/biases: full block, constant index -> VMEM-resident across steps
    w_specs = [pl.BlockSpec(w.shape, lambda i: (0, 0)) for w in weights]

    # Scoped-VMEM budget; only override the default (16 MiB on v5e) when the
    # double-buffered tiles + temps + resident weights would come close to it.
    w_bytes = sum(w.size * w.dtype.itemsize for w in weights)
    vmem_est = (2 * 2 * TB * C * 4                 # in + out, double-buffered
                + 4 * TB * (2 * H + 2 * C) * 4     # ha / st_a / hb / st_b (f32)
                + 2 * w_bytes)
    cp_kwargs = dict(dimension_semantics=("parallel",))
    if vmem_est > 12 * 1024 * 1024:
        cp_kwargs["vmem_limit_bytes"] = int(min(vmem_est * 2, 100 * 1024 * 1024))

    return pl.pallas_call(
        coupling_kernel,
        out_shape=jax.ShapeDtypeStruct((B, C), jnp.float32),
        grid=grid,
        in_specs=[data_spec] + w_specs,
        out_specs=data_spec,
        compiler_params=pltpu.CompilerParams(**cp_kwargs),
    )(u, *weights)


def _reference_forward(u, params, perm, perm_inv):
    """Pure-JAX reference mirroring the PyTorch module semantics (unfused)."""
    def mlp(x, p):
        w1, b1, w2, b2 = p
        return jnp.maximum(x @ w1 + b1, 0.0) @ w2 + b2

    c = u.shape[1] // 2
    u_p = u[:, perm]
    u1, u2 = u_p[:, :c], u_p[:, c:]
    v1 = u1 * jnp.exp(jnp.minimum(mlp(u2, params["S2"]), EXTREME)) + mlp(u2, params["T2"])
    v2 = u2 * jnp.exp(jnp.minimum(mlp(v1, params["S1"]), EXTREME)) + mlp(v1, params["T1"])
    v = jnp.concatenate([v1, v2], axis=1)
    return v[:, perm_inv]


def _init_net(key, c, hidden):
    k1, k2, k3, k4 = jax.random.split(key, 4)
    w1 = 0.1 * jax.random.normal(k1, (c, hidden), jnp.float32)
    b1 = 0.1 * jax.random.normal(k2, (1, hidden), jnp.float32)
    w2 = 0.1 * jax.random.normal(k3, (hidden, c), jnp.float32)
    b2 = 0.1 * jax.random.normal(k4, (1, c), jnp.float32)
    return (w1, b1, w2, b2)


if __name__ == "__main__":
    key = jax.random.PRNGKey(0)
    B, C, HIDDEN = 24, 32, 32     # batch, numChannels, MLP hidden width
    c = C // 2

    k_u, k_perm, k_s1, k_t1, k_s2, k_t2 = jax.random.split(key, 6)
    u = jax.random.normal(k_u, (B, C), jnp.float32)

    # deterministic channel permutation (torch.randperm equivalent)
    perm = jax.random.permutation(k_perm, C)
    perm_inv = jnp.argsort(perm)

    params = {
        "S1": _init_net(k_s1, c, HIDDEN),
        "T1": _init_net(k_t1, c, HIDDEN),
        "S2": _init_net(k_s2, c, HIDDEN),
        "T2": _init_net(k_t2, c, HIDDEN),
    }

    v_ref = _reference_forward(u, params, perm, perm_inv)

    # f32-MXU path: must match the f32 reference tightly.  At B=24 this runs a
    # 2-step "parallel" grid (TB=16) with one ragged/masked tail block.
    prep_f32 = prepare_invertible_block(params, perm, mxu_dtype=jnp.float32)
    v_f32 = jax.block_until_ready(invertible_block_forward(u, prep_f32))
    assert v_f32.shape == u.shape and v_f32.dtype == jnp.float32
    assert jnp.allclose(v_f32, v_ref, atol=1e-4, rtol=1e-4), "f32 mismatch vs reference"

    # bf16-MXU operands (default path for v5e/v6e/v7x throughput); f32
    # accumulation + elementwise, so only matmul rounding differs.
    prep_bf16 = prepare_invertible_block(params, perm)
    v_bf16 = jax.block_until_ready(invertible_block_forward(u, prep_bf16))
    assert jnp.allclose(v_bf16, v_ref, atol=1e-1, rtol=5e-2), "bf16 mismatch vs reference"

    print("KERNEL_OK")
</pallas_src>

<mosaic_0001>
module attributes {stable_mosaic.version = 11 : i64} {
  func.func @coupling_kernel(%arg0: i32, %arg1: memref<16x32xf32, #tpu.memory_space<vmem>>, %arg2: memref<32x64xf32, #tpu.memory_space<vmem>>, %arg3: memref<1x64xf32, #tpu.memory_space<vmem>>, %arg4: memref<64x64xf32, #tpu.memory_space<vmem>>, %arg5: memref<1x64xf32, #tpu.memory_space<vmem>>, %arg6: memref<32x64xf32, #tpu.memory_space<vmem>>, %arg7: memref<1x64xf32, #tpu.memory_space<vmem>>, %arg8: memref<64x64xf32, #tpu.memory_space<vmem>>, %arg9: memref<1x64xf32, #tpu.memory_space<vmem>>, %arg10: memref<16x32xf32, #tpu.memory_space<vmem>>) attributes {dimension_semantics = [#tpu.dimension_semantics<parallel>], iteration_bounds = array<i64: 2>, scalar_prefetch = 0 : i64, scratch_operands = 0 : i64, tpu.core_type = #tpu.core_type<tc>, window_params = [{transform_indices = @transform_0, window_bounds = array<i64: 16, 32>}, {pipeline_mode = #tpu.pipeline_mode<synchronous>, transform_indices = @transform_1, window_bounds = array<i64: 32, 64>}, {pipeline_mode = #tpu.pipeline_mode<synchronous>, transform_indices = @transform_2, window_bounds = array<i64: 1, 64>}, {pipeline_mode = #tpu.pipeline_mode<synchronous>, transform_indices = @transform_3, window_bounds = array<i64: 64, 64>}, {pipeline_mode = #tpu.pipeline_mode<synchronous>, transform_indices = @transform_4, window_bounds = array<i64: 1, 64>}, {pipeline_mode = #tpu.pipeline_mode<synchronous>, transform_indices = @transform_5, window_bounds = array<i64: 32, 64>}, {pipeline_mode = #tpu.pipeline_mode<synchronous>, transform_indices = @transform_6, window_bounds = array<i64: 1, 64>}, {pipeline_mode = #tpu.pipeline_mode<synchronous>, transform_indices = @transform_7, window_bounds = array<i64: 64, 64>}, {pipeline_mode = #tpu.pipeline_mode<synchronous>, transform_indices = @transform_8, window_bounds = array<i64: 1, 64>}, {transform_indices = @transform_9, window_bounds = array<i64: 16, 32>}]} {
    %c0 = arith.constant 0 : index
    %c0_0 = arith.constant 0 : index
    %0 = vector.load %arg1[%c0, %c0_0] : memref<16x32xf32, #tpu.memory_space<vmem>>, vector<16x32xf32>
    %c0_1 = arith.constant 0 : index
    %c0_2 = arith.constant 0 : index
    %1 = vector.load %arg2[%c0_1, %c0_2] : memref<32x64xf32, #tpu.memory_space<vmem>>, vector<32x64xf32>
    %cst = arith.constant dense<0.000000e+00> : vector<16x64xf32>
    %2 = tpu.matmul %0, %1, %cst {dimension_numbers = #tpu.dot_dimension_numbers<[1], [0], [0], [1], [0, 0, 1, 1], [], []>} : vector<16x32xf32>, vector<32x64xf32>, vector<16x64xf32> -> vector<16x64xf32>
    %c0_3 = arith.constant 0 : index
    %c0_4 = arith.constant 0 : index
    %3 = vector.load %arg3[%c0_3, %c0_4] : memref<1x64xf32, #tpu.memory_space<vmem>>, vector<1x64xf32>
    %4 = vector.broadcast %3 : vector<1x64xf32> to vector<16x64xf32>
    %5 = arith.addf %2, %4 : vector<16x64xf32>
    %cst_5 = arith.constant 0.000000e+00 : f32
    %6 = vector.broadcast %cst_5 : f32 to vector<16x64xf32>
    %7 = arith.maximumf %5, %6 : vector<16x64xf32>
    %c0_6 = arith.constant 0 : index
    %c0_7 = arith.constant 0 : index
    %8 = vector.load %arg4[%c0_6, %c0_7] : memref<64x64xf32, #tpu.memory_space<vmem>>, vector<64x64xf32>
    %cst_8 = arith.constant dense<0.000000e+00> : vector<16x64xf32>
    %9 = tpu.matmul %7, %8, %cst_8 {dimension_numbers = #tpu.dot_dimension_numbers<[1], [0], [0], [1], [0, 0, 1, 1], [], []>} : vector<16x64xf32>, vector<64x64xf32>, vector<16x64xf32> -> vector<16x64xf32>
    %c0_9 = arith.constant 0 : index
    %c0_10 = arith.constant 0 : index
    %10 = vector.load %arg5[%c0_9, %c0_10] : memref<1x64xf32, #tpu.memory_space<vmem>>, vector<1x64xf32>
    %11 = vector.broadcast %10 : vector<1x64xf32> to vector<16x64xf32>
    %12 = arith.addf %9, %11 : vector<16x64xf32>
    %13 = vector.extract_strided_slice %12 {offsets = [0, 0], sizes = [16, 32], strides = [1, 1]} : vector<16x64xf32> to vector<16x32xf32>
    %14 = vector.extract_strided_slice %12 {offsets = [0, 32], sizes = [16, 32], strides = [1, 1]} : vector<16x64xf32> to vector<16x32xf32>
    %cst_11 = arith.constant 1.000000e+02 : f32
    %15 = vector.broadcast %cst_11 : f32 to vector<16x32xf32>
    %16 = arith.minimumf %13, %15 : vector<16x32xf32>
    %17 = math.exp %16 : vector<16x32xf32>
    %18 = arith.mulf %0, %17 : vector<16x32xf32>
    %19 = arith.addf %18, %14 : vector<16x32xf32>
    %c0_12 = arith.constant 0 : index
    %c0_13 = arith.constant 0 : index
    %20 = vector.load %arg6[%c0_12, %c0_13] : memref<32x64xf32, #tpu.memory_space<vmem>>, vector<32x64xf32>
    %cst_14 = arith.constant dense<0.000000e+00> : vector<16x64xf32>
    %21 = tpu.matmul %19, %20, %cst_14 {dimension_numbers = #tpu.dot_dimension_numbers<[1], [0], [0], [1], [0, 0, 1, 1], [], []>} : vector<16x32xf32>, vector<32x64xf32>, vector<16x64xf32> -> vector<16x64xf32>
    %c0_15 = arith.constant 0 : index
    %c0_16 = arith.constant 0 : index
    %22 = vector.load %arg7[%c0_15, %c0_16] : memref<1x64xf32, #tpu.memory_space<vmem>>, vector<1x64xf32>
    %23 = vector.broadcast %22 : vector<1x64xf32> to vector<16x64xf32>
    %24 = arith.addf %21, %23 : vector<16x64xf32>
    %cst_17 = arith.constant 0.000000e+00 : f32
    %25 = vector.broadcast %cst_17 : f32 to vector<16x64xf32>
    %26 = arith.maximumf %24, %25 : vector<16x64xf32>
    %c0_18 = arith.constant 0 : index
    %c0_19 = arith.constant 0 : index
    %27 = vector.load %arg8[%c0_18, %c0_19] : memref<64x64xf32, #tpu.memory_space<vmem>>, vector<64x64xf32>
    %cst_20 = arith.constant dense<0.000000e+00> : vector<16x64xf32>
    %28 = tpu.matmul %26, %27, %cst_20 {dimension_numbers = #tpu.dot_dimension_numbers<[1], [0], [0], [1], [0, 0, 1, 1], [], []>} : vector<16x64xf32>, vector<64x64xf32>, vector<16x64xf32> -> vector<16x64xf32>
    %c0_21 = arith.constant 0 : index
    %c0_22 = arith.constant 0 : index
    %29 = vector.load %arg9[%c0_21, %c0_22] : memref<1x64xf32, #tpu.memory_space<vmem>>, vector<1x64xf32>
    %30 = vector.broadcast %29 : vector<1x64xf32> to vector<16x64xf32>
    %31 = arith.addf %28, %30 : vector<16x64xf32>
    %32 = vector.extract_strided_slice %31 {offsets = [0, 0], sizes = [16, 32], strides = [1, 1]} : vector<16x64xf32> to vector<16x32xf32>
    %33 = vector.extract_strided_slice %31 {offsets = [0, 32], sizes = [16, 32], strides = [1, 1]} : vector<16x64xf32> to vector<16x32xf32>
    %cst_23 = arith.constant 1.000000e+02 : f32
    %34 = vector.broadcast %cst_23 : f32 to vector<16x32xf32>
    %35 = arith.minimumf %32, %34 : vector<16x32xf32>
    %36 = math.exp %35 : vector<16x32xf32>
    %37 = arith.mulf %19, %36 : vector<16x32xf32>
    %38 = arith.addf %37, %33 : vector<16x32xf32>
    %c0_24 = arith.constant 0 : index
    %c0_25 = arith.constant 0 : index
    %39 = vector.load %arg10[%c0_24, %c0_25] : memref<16x32xf32, #tpu.memory_space<vmem>>, vector<16x32xf32>
    tpu.vector_store %arg10[%c0_24, %c0_25], %38 {strides = array<i32>} : memref<16x32xf32, #tpu.memory_space<vmem>>, vector<16x32xf32>,
    return
  }
  func.func @transform_0(%arg0: i32) -> (i32, i32) {
    %c0_i32 = arith.constant 0 : i32
    %c0_i32_0 = arith.constant 0 : i32
    return %arg0, %c0_i32 : i32, i32
  }
  func.func @transform_1(%arg0: i32) -> (i32, i32) {
    %c0_i32 = arith.constant 0 : i32
    %c0_i32_0 = arith.constant 0 : i32
    %c0_i32_1 = arith.constant 0 : i32
    return %c0_i32, %c0_i32_0 : i32, i32
  }
  func.func @transform_2(%arg0: i32) -> (i32, i32) {
    %c0_i32 = arith.constant 0 : i32
    %c0_i32_0 = arith.constant 0 : i32
    %c0_i32_1 = arith.constant 0 : i32
    return %c0_i32, %c0_i32_0 : i32, i32
  }
  func.func @transform_3(%arg0: i32) -> (i32, i32) {
    %c0_i32 = arith.constant 0 : i32
    %c0_i32_0 = arith.constant 0 : i32
    %c0_i32_1 = arith.constant 0 : i32
    return %c0_i32, %c0_i32_0 : i32, i32
  }
  func.func @transform_4(%arg0: i32) -> (i32, i32) {
    %c0_i32 = arith.constant 0 : i32
    %c0_i32_0 = arith.constant 0 : i32
    %c0_i32_1 = arith.constant 0 : i32
    return %c0_i32, %c0_i32_0 : i32, i32
  }
  func.func @transform_5(%arg0: i32) -> (i32, i32) {
    %c0_i32 = arith.constant 0 : i32
    %c0_i32_0 = arith.constant 0 : i32
    %c0_i32_1 = arith.constant 0 : i32
    return %c0_i32, %c0_i32_0 : i32, i32
  }
  func.func @transform_6(%arg0: i32) -> (i32, i32) {
    %c0_i32 = arith.constant 0 : i32
    %c0_i32_0 = arith.constant 0 : i32
    %c0_i32_1 = arith.constant 0 : i32
    return %c0_i32, %c0_i32_0 : i32, i32
  }
  func.func @transform_7(%arg0: i32) -> (i32, i32) {
    %c0_i32 = arith.constant 0 : i32
    %c0_i32_0 = arith.constant 0 : i32
    %c0_i32_1 = arith.constant 0 : i32
    return %c0_i32, %c0_i32_0 : i32, i32
  }
  func.func @transform_8(%arg0: i32) -> (i32, i32) {
    %c0_i32 = arith.constant 0 : i32
    %c0_i32_0 = arith.constant 0 : i32
    %c0_i32_1 = arith.constant 0 : i32
    return %c0_i32, %c0_i32_0 : i32, i32
  }
  func.func @transform_9(%arg0: i32) -> (i32, i32) {
    %c0_i32 = arith.constant 0 : i32
    %c0_i32_0 = arith.constant 0 : i32
    return %arg0, %c0_i32 : i32, i32
  }
}

</mosaic_0001>

<llo_original>
// kernel: invertible_block_forward.1
$region0: #{invertible_block_forward.1}
  #allocation0 [shape = 'u32[]', space=smem, size = 0x4, offset = 0x4, fixed_abs, tag = 'smem constant byte address 0x4 - core index']
  #allocation1 [shape = 'u32[144,128]{1,0:T(1,128)}', space=vmem, size = 0x12000, scoped, tag = 'internal scratch']
  %s0 = inlined_call_operand.hbm [shape: f32[24,32], index: 0, kind: input, shape index: {}]
  %s1 = inlined_call_operand.hbm [shape: f32[32,64], index: 1, kind: input, shape index: {}]
  %s2 = inlined_call_operand.vmem [shape: f32[1,64], index: 2, kind: input, shape index: {}]
  %s3 = inlined_call_operand.hbm [shape: f32[64,64], index: 3, kind: input, shape index: {}]
  %s4 = inlined_call_operand.vmem [shape: f32[1,64], index: 4, kind: input, shape index: {}]
  %s5 = inlined_call_operand.hbm [shape: f32[32,64], index: 5, kind: input, shape index: {}]
  %s6 = inlined_call_operand.vmem [shape: f32[1,64], index: 6, kind: input, shape index: {}]
  %s7 = inlined_call_operand.hbm [shape: f32[64,64], index: 7, kind: input, shape index: {}]
  %s8 = inlined_call_operand.vmem [shape: f32[1,64], index: 8, kind: input, shape index: {}]
  %s9 = inlined_call_operand.hbm [shape: f32[24,32], index: 9, kind: output, shape index: {}]
  %s10 = sld [smem:[#allocation0]]
  $region89: #{invertible_block_forward.1} parent=0
    _
  %s12 = ssub.s32 1, %s10
  %s13 = scalar_select 0, %s12, %s10
  $region1: #{invertible_block_forward.1} parent=0
    #allocation2 [shape = 'u8[16384]{0}', space=vmem, size = 0x4000, scoped, tag = 'input window, operand 0']
    #allocation3 [shape = 's32[2]{0}', space=sflag, size = 0x8, scoped, tag = 'scoped memory for invertible_block_forward.1']
    #allocation4 [shape = 's32[2]{0}', space=sflag, size = 0x8, scoped, tag = 'scoped memory for invertible_block_forward.1']
    #allocation5 [shape = 'u8[16384]{0}', space=vmem, size = 0x4000, scoped, tag = 'input window, operand 1, single buffered']
    #allocation6 [shape = 's32[1]{0}', space=sflag, size = 0x4, scoped, tag = 'scoped memory for invertible_block_forward.1']
    #allocation7 [shape = 'u8[32768]{0}', space=vmem, size = 0x8000, scoped, tag = 'input window, operand 3, single buffered']
    #allocation8 [shape = 'u8[16384]{0}', space=vmem, size = 0x4000, scoped, tag = 'input window, operand 5, single buffered']
    #allocation9 [shape = 's32[1]{0}', space=sflag, size = 0x4, scoped, tag = 'scoped memory for invertible_block_forward.1']
    #allocation10 [shape = 'u8[32768]{0}', space=vmem, size = 0x8000, scoped, tag = 'input window, operand 7, single buffered']
    #allocation11 [shape = 'u8[16384]{0}', space=vmem, size = 0x4000, scoped, tag = 'output window, operand 0']
    %14 = vsyncpa [#allocation3], 0
    %s15 = scalar_lea.sflag [#allocation3], 1
    %16 = vsyncpa %s15, 0
    %17 = vsyncpa [#allocation6], 0
    %18 = vsyncpa [#allocation9], 0
    %19 = vsyncpa [#allocation4], 0
    %s20 = scalar_lea.sflag [#allocation4], 1
    %21 = vsyncpa %s20, 0
    loop: start=0, step=1, limit=4
    $region2: #{invertible_block_forward.1} parent=1 // loop_pre_header
      _
    $region3: #{invertible_block_forward.1} parent=1 // loop_header
      %s23 = sphi 0, %s27
      %p24 = scmp.ge.s32.totalorder %s23, 4
      %s33 = sphi 0, %s35
      %s36 = sphi 0, %s33
      %s37 = sphi 0, %s36
      %s53 = sphi 0, %s37
      %s57 = sphi 0, %s57
      %s59 = sphi 0, %s57
      %s60 = sphi 0, %s59
      %s74 = sphi 0, %s60
      %s78 = sphi 0, %s78
      %s80 = sphi 0, %s78
      %s81 = sphi 0, %s80
      %s95 = sphi 0, %s81
      %s99 = sphi 0, %s99
      %s101 = sphi 0, %s99
      %s102 = sphi 0, %s101
      %s116 = sphi 0, %s102
      %s120 = sphi 0, %s120
      %s122 = sphi 0, %s120
      %s123 = sphi 0, %s122
      %s137 = sphi 0, %s123
      %s141 = sphi 0, %s141
      %s143 = sphi 0, %s141
      %s144 = sphi 0, %s143
      %s158 = sphi 0, %s144
      %s162 = sphi 0, %s162
      %s164 = sphi 0, %s162
      %s165 = sphi 0, %s164
      %s179 = sphi 0, %s165
      %s183 = sphi 0, %s183
      %s185 = sphi 0, %s183
      %s186 = sphi 0, %s185
      %s200 = sphi 0, %s186
      %s204 = sphi 0, %s204
      %s206 = sphi 0, %s204
      %s207 = sphi 0, %s206
      %s221 = sphi 0, %s207
      %s227 = sphi 0, %s229
      %s230 = sphi 0, %s227
      %s231 = sphi 0, %s230
      %s247 = sphi 0, %s231
    $region4: #{invertible_block_forward.1} parent=1 // loop_header_branch
      %26 = sbr.rel (%p24) target = $region8
    $region5: #{invertible_block_forward.1} parent=1 // loop_body
      %s28 = ssub.s32 %s23, 1
      %s29 = ssub.s32 %s23, 2
      %s30 = sadd.s32 %s23, 1
      %s31 = ssub.s32 %s23, %s30
      %p32 = scmp.eq.s32.totalorder %s31, 0
      %s34 = sadd.s32 %s33, 1
      %s35 = scalar_select %p32, %s33, %s34
      %p38 = pneg %p32
      %p39 = scmp.eq.s32.totalorder %s23, 1
      %p40 = por %p38, %p39
      %p41 = scmp.ne.s32.totalorder %s33, %s36
      %p42 = scmp.eq.s32.totalorder %s23, 0
      %p43 = por %p41, %p42
      %p44 = scmp.ne.s32.totalorder %s33, %s36
      %p45 = scmp.eq.s32.totalorder %s28, 1
      %p46 = por %p44, %p45
      %p47 = scmp.ne.s32.totalorder %s36, %s37
      %p48 = scmp.eq.s32.totalorder %s28, 0
      %p49 = por %p47, %p48
      %p50 = scmp.ne.s32.totalorder %s36, %s37
      %p51 = scmp.eq.s32.totalorder %s29, 1
      %p52 = por %p50, %p51
      %p54 = scmp.ne.s32.totalorder %s37, %s53
      %p55 = scmp.eq.s32.totalorder %s29, 0
      %p56 = por %p54, %p55
      %s58 = sadd.s32 %s57, 1
      %p61 = scmp.eq.s32.totalorder %s23, 1
      %p62 = scmp.ne.s32.totalorder %s57, %s59
      %p63 = scmp.eq.s32.totalorder %s23, 0
      %p64 = por %p62, %p63
      %p65 = scmp.ne.s32.totalorder %s57, %s59
      %p66 = scmp.eq.s32.totalorder %s28, 1
      %p67 = por %p65, %p66
      %p68 = scmp.ne.s32.totalorder %s59, %s60
      %p69 = scmp.eq.s32.totalorder %s28, 0
      %p70 = por %p68, %p69
      %p71 = scmp.ne.s32.totalorder %s59, %s60
      %p72 = scmp.eq.s32.totalorder %s29, 1
      %p73 = por %p71, %p72
      %p75 = scmp.ne.s32.totalorder %s60, %s74
      %p76 = scmp.eq.s32.totalorder %s29, 0
      %p77 = por %p75, %p76
      %s79 = sadd.s32 %s78, 1
      %p82 = scmp.eq.s32.totalorder %s23, 1
      %p83 = scmp.ne.s32.totalorder %s78, %s80
      %p84 = scmp.eq.s32.totalorder %s23, 0
      %p85 = por %p83, %p84
      %p86 = scmp.ne.s32.totalorder %s78, %s80
      %p87 = scmp.eq.s32.totalorder %s28, 1
      %p88 = por %p86, %p87
      %p89 = scmp.ne.s32.totalorder %s80, %s81
      %p90 = scmp.eq.s32.totalorder %s28, 0
      %p91 = por %p89, %p90
      %p92 = scmp.ne.s32.totalorder %s80, %s81
      %p93 = scmp.eq.s32.totalorder %s29, 1
      %p94 = por %p92, %p93
      %p96 = scmp.ne.s32.totalorder %s81, %s95
      %p97 = scmp.eq.s32.totalorder %s29, 0
      %p98 = por %p96, %p97
      %s100 = sadd.s32 %s99, 1
      %p103 = scmp.eq.s32.totalorder %s23, 1
      %p104 = scmp.ne.s32.totalorder %s99, %s101
      %p105 = scmp.eq.s32.totalorder %s23, 0
      %p106 = por %p104, %p105
      %p107 = scmp.ne.s32.totalorder %s99, %s101
      %p108 = scmp.eq.s32.totalorder %s28, 1
      %p109 = por %p107, %p108
      %p110 = scmp.ne.s32.totalorder %s101, %s102
      %p111 = scmp.eq.s32.totalorder %s28, 0
      %p112 = por %p110, %p111
      %p113 = scmp.ne.s32.totalorder %s101, %s102
      %p114 = scmp.eq.s32.totalorder %s29, 1
      %p115 = por %p113, %p114
      %p117 = scmp.ne.s32.totalorder %s102, %s116
      %p118 = scmp.eq.s32.totalorder %s29, 0
      %p119 = por %p117, %p118
      %s121 = sadd.s32 %s120, 1
      %p124 = scmp.eq.s32.totalorder %s23, 1
      %p125 = scmp.ne.s32.totalorder %s120, %s122
      %p126 = scmp.eq.s32.totalorder %s23, 0
      %p127 = por %p125, %p126
      %p128 = scmp.ne.s32.totalorder %s120, %s122
      %p129 = scmp.eq.s32.totalorder %s28, 1
      %p130 = por %p128, %p129
      %p131 = scmp.ne.s32.totalorder %s122, %s123
      %p132 = scmp.eq.s32.totalorder %s28, 0
      %p133 = por %p131, %p132
      %p134 = scmp.ne.s32.totalorder %s122, %s123
      %p135 = scmp.eq.s32.totalorder %s29, 1
      %p136 = por %p134, %p135
      %p138 = scmp.ne.s32.totalorder %s123, %s137
      %p139 = scmp.eq.s32.totalorder %s29, 0
      %p140 = por %p138, %p139
      %s142 = sadd.s32 %s141, 1
      %p145 = scmp.eq.s32.totalorder %s23, 1
      %p146 = scmp.ne.s32.totalorder %s141, %s143
      %p147 = scmp.eq.s32.totalorder %s23, 0
      %p148 = por %p146, %p147
      %p149 = scmp.ne.s32.totalorder %s141, %s143
      %p150 = scmp.eq.s32.totalorder %s28, 1
      %p151 = por %p149, %p150
      %p152 = scmp.ne.s32.totalorder %s143, %s144
      %p153 = scmp.eq.s32.totalorder %s28, 0
      %p154 = por %p152, %p153
      %p155 = scmp.ne.s32.totalorder %s143, %s144
      %p156 = scmp.eq.s32.totalorder %s29, 1
      %p157 = por %p155, %p156
      %p159 = scmp.ne.s32.totalorder %s144, %s158
      %p160 = scmp.eq.s32.totalorder %s29, 0
      %p161 = por %p159, %p160
      %s163 = sadd.s32 %s162, 1
      %p166 = scmp.eq.s32.totalorder %s23, 1
      %p167 = scmp.ne.s32.totalorder %s162, %s164
      %p168 = scmp.eq.s32.totalorder %s23, 0
      %p169 = por %p167, %p168
      %p170 = scmp.ne.s32.totalorder %s162, %s164
      %p171 = scmp.eq.s32.totalorder %s28, 1
      %p172 = por %p170, %p171
      %p173 = scmp.ne.s32.totalorder %s164, %s165
      %p174 = scmp.eq.s32.totalorder %s28, 0
      %p175 = por %p173, %p174
      %p176 = scmp.ne.s32.totalorder %s164, %s165
      %p177 = scmp.eq.s32.totalorder %s29, 1
      %p178 = por %p176, %p177
      %p180 = scmp.ne.s32.totalorder %s165, %s179
      %p181 = scmp.eq.s32.totalorder %s29, 0
      %p182 = por %p180, %p181
      %s184 = sadd.s32 %s183, 1
      %p187 = scmp.eq.s32.totalorder %s23, 1
      %p188 = scmp.ne.s32.totalorder %s183, %s185
      %p189 = scmp.eq.s32.totalorder %s23, 0
      %p190 = por %p188, %p189
      %p191 = scmp.ne.s32.totalorder %s183, %s185
      %p192 = scmp.eq.s32.totalorder %s28, 1
      %p193 = por %p191, %p192
      %p194 = scmp.ne.s32.totalorder %s185, %s186
      %p195 = scmp.eq.s32.totalorder %s28, 0
      %p196 = por %p194, %p195
      %p197 = scmp.ne.s32.totalorder %s185, %s186
      %p198 = scmp.eq.s32.totalorder %s29, 1
      %p199 = por %p197, %p198
      %p201 = scmp.ne.s32.totalorder %s186, %s200
      %p202 = scmp.eq.s32.totalorder %s29, 0
      %p203 = por %p201, %p202
      %s205 = sadd.s32 %s204, 1
      %p208 = scmp.eq.s32.totalorder %s23, 1
      %p209 = scmp.ne.s32.totalorder %s204, %s206
      %p210 = scmp.eq.s32.totalorder %s23, 0
      %p211 = por %p209, %p210
      %p212 = scmp.ne.s32.totalorder %s204, %s206
      %p213 = scmp.eq.s32.totalorder %s28, 1
      %p214 = por %p212, %p213
      %p215 = scmp.ne.s32.totalorder %s206, %s207
      %p216 = scmp.eq.s32.totalorder %s28, 0
      %p217 = por %p215, %p216
      %p218 = scmp.ne.s32.totalorder %s206, %s207
      %p219 = scmp.eq.s32.totalorder %s29, 1
      %p220 = por %p218, %p219
      %p222 = scmp.ne.s32.totalorder %s207, %s221
      %p223 = scmp.eq.s32.totalorder %s29, 0
      %p224 = por %p222, %p223
      %s225 = ssub.s32 %s23, %s30
      %p226 = scmp.eq.s32.totalorder %s225, 0
      %s228 = sadd.s32 %s227, 1
      %s229 = scalar_select %p226, %s227, %s228
      %p232 = pneg %p226
      %p233 = scmp.eq.s32.totalorder %s23, 1
      %p234 = por %p232, %p233
      %p235 = scmp.ne.s32.totalorder %s227, %s230
      %p236 = scmp.eq.s32.totalorder %s23, 0
      %p237 = por %p235, %p236
      %p238 = scmp.ne.s32.totalorder %s227, %s230
      %p239 = scmp.eq.s32.totalorder %s28, 1
      %p240 = por %p238, %p239
      %p241 = scmp.ne.s32.totalorder %s230, %s231
      %p242 = scmp.eq.s32.totalorder %s28, 0
      %p243 = por %p241, %p242
      %p244 = scmp.ne.s32.totalorder %s230, %s231
      %p245 = scmp.eq.s32.totalorder %s29, 1
      %p246 = por %p244, %p245
      %p248 = scmp.ne.s32.totalorder %s231, %s247
      %p249 = scmp.eq.s32.totalorder %s29, 0
      %p250 = por %p248, %p249
      %p251 = scmp.le.s32.totalorder 1, %s23
      %p252 = scmp.lt.s32.totalorder %s23, 3
      %p253 = pnand %p251, %p252
      %p254 = pneg %p253
      // Predicated region
      $region9: #{invertible_block_forward.1} parent=5 // pred_check
        _
      $region10: #{invertible_block_forward.1} parent=5 // pred_check_branch
        %256 = sbr.rel (%p253) target = $region12
      $region11: #{invertible_block_forward.1} parent=5 // pred_region
        %s257 = ssub.s32 %s23, 1
        // Predicated region
        $region13: #{invertible_block_forward.1} parent=11 // pred_check
          %p258 = pneg %p70
        $region14: #{invertible_block_forward.1} parent=11 // pred_check_branch
          %260 = sbr.rel (%p258) target = $region16
        $region15: #{invertible_block_forward.1} parent=11 // pred_region
          %s262 = ssub.s32 512, 512
          %263 = vsyncadd [#allocation6], %s262
          %s264 = sshll.u32 [#allocation5], 4
          %s265 = int_to_ptr.vmem [resolvable:$true] %s264
          %270 = dma.hbm_to_vmem [thread:$0]  %s1, 512, %s265, [#allocation6], 128, 128, 8
        $region16: #{invertible_block_forward.1} parent=11 // pred_fallthru
          _
        // Predicated region
        $region17: #{invertible_block_forward.1} parent=11 // pred_check
          %p271 = pneg %p91
        $region18: #{invertible_block_forward.1} parent=11 // pred_check_branch
          %273 = sbr.rel (%p271) target = $region20
        $region19: #{invertible_block_forward.1} parent=11 // pred_region
          _
        $region20: #{invertible_block_forward.1} parent=11 // pred_fallthru
          _
        // Predicated region
        $region21: #{invertible_block_forward.1} parent=11 // pred_check
          %p274 = pneg %p112
        $region22: #{invertible_block_forward.1} parent=11 // pred_check_branch
          %276 = sbr.rel (%p274) target = $region24
        $region23: #{invertible_block_forward.1} parent=11 // pred_region
          %s278 = ssub.s32 1024, 1024
          %279 = vsyncadd [#allocation6], %s278
          %s280 = sshll.u32 [#allocation7], 4
          %s281 = int_to_ptr.vmem [resolvable:$true] %s280
          %286 = dma.hbm_to_vmem [thread:$0]  %s3, 1024, %s281, [#allocation6], 128, 128, 8
        $region24: #{invertible_block_forward.1} parent=11 // pred_fallthru
          _
        // Predicated region
        $region25: #{invertible_block_forward.1} parent=11 // pred_check
          %p287 = pneg %p133
        $region26: #{invertible_block_forward.1} parent=11 // pred_check_branch
          %289 = sbr.rel (%p287) target = $region28
        $region27: #{invertible_block_forward.1} parent=11 // pred_region
          _
        $region28: #{invertible_block_forward.1} parent=11 // pred_fallthru
          _
        // Predicated region
        $region29: #{invertible_block_forward.1} parent=11 // pred_check
          %p290 = pneg %p154
        $region30: #{invertible_block_forward.1} parent=11 // pred_check_branch
          %292 = sbr.rel (%p290) target = $region32
        $region31: #{invertible_block_forward.1} parent=11 // pred_region
          %s294 = ssub.s32 512, 512
          %295 = vsyncadd [#allocation9], %s294
          %s296 = sshll.u32 [#allocation8], 4
          %s297 = int_to_ptr.vmem [resolvable:$true] %s296
          %302 = dma.hbm_to_vmem [thread:$0]  %s5, 512, %s297, [#allocation9], 128, 128, 8
        $region32: #{invertible_block_forward.1} parent=11 // pred_fallthru
          _
        // Predicated region
        $region33: #{invertible_block_forward.1} parent=11 // pred_check
          %p303 = pneg %p175
        $region34: #{invertible_block_forward.1} parent=11 // pred_check_branch
          %305 = sbr.rel (%p303) target = $region36
        $region35: #{invertible_block_forward.1} parent=11 // pred_region
          _
        $region36: #{invertible_block_forward.1} parent=11 // pred_fallthru
          _
        // Predicated region
        $region37: #{invertible_block_forward.1} parent=11 // pred_check
          %p306 = pneg %p196
        $region38: #{invertible_block_forward.1} parent=11 // pred_check_branch
          %308 = sbr.rel (%p306) target = $region40
        $region39: #{invertible_block_forward.1} parent=11 // pred_region
          %s310 = ssub.s32 1024, 1024
          %311 = vsyncadd [#allocation9], %s310
          %s312 = sshll.u32 [#allocation10], 4
          %s313 = int_to_ptr.vmem [resolvable:$true] %s312
          %318 = dma.hbm_to_vmem [thread:$0]  %s7, 1024, %s313, [#allocation9], 128, 128, 8
        $region40: #{invertible_block_forward.1} parent=11 // pred_fallthru
          _
        // Predicated region
        $region41: #{invertible_block_forward.1} parent=11 // pred_check
          %p319 = pneg %p217
        $region42: #{invertible_block_forward.1} parent=11 // pred_check_branch
          %321 = sbr.rel (%p319) target = $region44
        $region43: #{invertible_block_forward.1} parent=11 // pred_region
          _
        $region44: #{invertible_block_forward.1} parent=11 // pred_fallthru
          _
      $region12: #{invertible_block_forward.1} parent=5 // pred_fallthru
        _
      %p322 = scmp.lt.s32.totalorder %s23, 2
      // Predicated region
      $region45: #{invertible_block_forward.1} parent=5 // pred_check
        %p323 = pneg %p322
      $region46: #{invertible_block_forward.1} parent=5 // pred_check_branch
        %325 = sbr.rel (%p323) target = $region48
      $region47: #{invertible_block_forward.1} parent=5 // pred_region
        // Predicated region
        $region49: #{invertible_block_forward.1} parent=47 // pred_check
          %p326 = pneg %p43
        $region50: #{invertible_block_forward.1} parent=47 // pred_check_branch
          %328 = sbr.rel (%p326) target = $region52
        $region51: #{invertible_block_forward.1} parent=47 // pred_region
          %s329 = sand.u32 %s33, 1
          %s330 = scalar_lea.sflag [#allocation3], %s329
          %s331 = sand.u32 %s33, 1
          %s332 = smul.addr %s331, 16
          %s333 = scalar_lea.vmem [#allocation2], %s332
          %s334 = smul.u32 2, %s23
          %s335 = ssub.s32 3, %s334
          %p336 = scmp.lt.s32.totalorder %s335, 2
          %s337 = scalar_select %p336, %s335, 2
          %s338 = smul.u32 128, %s337
          %s340 = ssub.s32 256, %s338
          %341 = vsyncadd %s330, %s340
          %p342 = scmp.ne.s32.totalorder 0, %s338
          %s343 = smul.addr %s334, 128
          %s344 = scalar_lea.hbm %s0, %s343
          %s345 = smul.u32 8, %s337
          %s346 = sshll.u32 %s333, 4
          %s347 = int_to_ptr.vmem [resolvable:$true] %s346
          %s348 = sshll.u32 %s345, 4
          %352 = dma.hbm_to_vmem [thread:$0]  (%p342), %s344, %s348, %s347, %s330, 128, 128, 8
        $region52: #{invertible_block_forward.1} parent=47 // pred_fallthru
          _
      $region48: #{invertible_block_forward.1} parent=5 // pred_fallthru
        _
      %p353 = scmp.le.s32.totalorder 1, %s23
      %p354 = scmp.lt.s32.totalorder %s23, 3
      %p355 = pnand %p353, %p354
      %p356 = pneg %p355
      // Predicated region
      $region53: #{invertible_block_forward.1} parent=5 // pred_check
        _
      $region54: #{invertible_block_forward.1} parent=5 // pred_check_branch
        %358 = sbr.rel (%p355) target = $region56
      $region55: #{invertible_block_forward.1} parent=5 // pred_region
        %s359 = ssub.s32 %s23, 1
        %s360 = sand.u32 %s36, 1
        %s361 = scalar_lea.sflag [#allocation3], %s360
        %s362 = sand.u32 %s36, 1
        %s363 = smul.addr %s362, 16
        %s364 = scalar_lea.vmem [#allocation2], %s363
        // Predicated region
        $region57: #{invertible_block_forward.1} parent=55 // pred_check
          %p365 = pneg %p49
        $region58: #{invertible_block_forward.1} parent=55 // pred_check_branch
          %367 = sbr.rel (%p365) target = $region60
        $region59: #{invertible_block_forward.1} parent=55 // pred_region
          %368 = dma.done %s361, 256
        $region60: #{invertible_block_forward.1} parent=55 // pred_fallthru
          _
        // Predicated region
        $region61: #{invertible_block_forward.1} parent=55 // pred_check
          %p369 = pneg %p70
        $region62: #{invertible_block_forward.1} parent=55 // pred_check_branch
          %371 = sbr.rel (%p369) target = $region64
        $region63: #{invertible_block_forward.1} parent=55 // pred_region
          %372 = dma.done [#allocation6], 512
        $region64: #{invertible_block_forward.1} parent=55 // pred_fallthru
          _
        // Predicated region
        $region65: #{invertible_block_forward.1} parent=55 // pred_check
          %p373 = pneg %p112
        $region66: #{invertible_block_forward.1} parent=55 // pred_check_branch
          %375 = sbr.rel (%p373) target = $region68
        $region67: #{invertible_block_forward.1} parent=55 // pred_region
          %376 = dma.done [#allocation6], 1024
        $region68: #{invertible_block_forward.1} parent=55 // pred_fallthru
          _
        // Predicated region
        $region69: #{invertible_block_forward.1} parent=55 // pred_check
          %p377 = pneg %p154
        $region70: #{invertible_block_forward.1} parent=55 // pred_check_branch
          %379 = sbr.rel (%p377) target = $region72
        $region71: #{invertible_block_forward.1} parent=55 // pred_region
          %380 = dma.done [#allocation9], 512
        $region72: #{invertible_block_forward.1} parent=55 // pred_fallthru
          _
        // Predicated region
        $region73: #{invertible_block_forward.1} parent=55 // pred_check
          %p381 = pneg %p196
        $region74: #{invertible_block_forward.1} parent=55 // pred_check_branch
          %383 = sbr.rel (%p381) target = $region76
        $region75: #{invertible_block_forward.1} parent=55 // pred_region
          %384 = dma.done [#allocation9], 1024
        $region76: #{invertible_block_forward.1} parent=55 // pred_fallthru
          _
        %s385 = sand.u32 %s36, 1
        %s386 = scalar_lea.sflag [#allocation3], %s385
        %s387 = sand.u32 %s36, 1
        %s388 = smul.addr %s387, 16
        %s389 = scalar_lea.vmem [#allocation2], %s388
        %p390 = pneg %p49
        %p391 = pneg %p46
        %p392 = pneg %p70
        %p393 = pneg %p67
        %p394 = pneg %p91
        %p395 = pneg %p88
        %p396 = pneg %p112
        %p397 = pneg %p109
        %p398 = pneg %p133
        %p399 = pneg %p130
        %p400 = pneg %p154
        %p401 = pneg %p151
        %p402 = pneg %p175
        %p403 = pneg %p172
        %p404 = pneg %p196
        %p405 = pneg %p193
        %p406 = pneg %p217
        %p407 = pneg %p214
        %p408 = pneg %p243
        %p409 = pneg %p240
        %s410 = sand.u32 %s230, 1
        %s411 = scalar_lea.sflag [#allocation4], %s410
        %s412 = sand.u32 %s230, 1
        %s413 = smul.addr %s412, 16
        %s414 = scalar_lea.vmem [#allocation11], %s413
        %s415 = smul.u32 2, %s28
        %s416 = ssub.s32 3, %s415
        %p417 = scmp.lt.s32.totalorder %s416, 2
        %s418 = scalar_select %p417, %s416, 2
        %s419 = smul.u32 128, %s418
        %s420 = smul.u32 2, %s28
        %s421 = ssub.s32 3, %s420
        %p422 = scmp.lt.s32.totalorder %s421, 2
        %s423 = scalar_select %p422, %s421, 2
        %s424 = smul.u32 128, %s423
        %v425 = vld [vmem:[%s364] sm:$0xff]
        %v426 = vld [vmem:[%s364 + $0x8] sm:$0xff]
        %v427 = vld [vmem:[#allocation5] sm:$0xff]
        %v428 = vld [vmem:[#allocation5 + $0x8] sm:$0xff]
        %v429 = vld [vmem:[#allocation5 + $0x10] sm:$0xff]
        %v430 = vld [vmem:[#allocation5 + $0x18] sm:$0xff]
        %v431 = vld [vmem:[%s2] sm:$0x1]
        %v433 = vlaneseq
        %v434 = vshrl.u32 %v433, 7
        %v435 = vsub.s32 0, %v434
        %v436 = vrot.slane %v431, %v435
        %vm438 = vcmask 261120
        %v440 = vsel %vm438, %v425, 0
        %v443 = vsel %vm438, %v426, 0
        %445 = vmatprep.subr.mxu0 0.0
        %446 = vmatpush1.msra.mxu0 %v427
        %447 = vmatprep.subr.mxu0 0.0
        %448 = vmatpush1.msra.mxu0 %v428
        %449 = vmatprep.subr.mxu0 0.0
        %450 = vmatpush1.msra.mxu0 %v429
        %451 = vmatprep.subr.mxu0 0.0
        %452 = vmatpush1.msra.mxu0 %v430
        %453 = vmatprep.subr.mxu0 0.0
        %454 = vmatpush1.msra.mxu0 0.0
        %455 = vmatprep.subr.mxu0 0.0
        %456 = vmatpush1.msra.mxu0 0.0
        %457 = vmatprep.subr.mxu0 0.0
        %458 = vmatpush1.msra.mxu0 0.0
        %459 = vmatprep.subr.mxu0 0.0
        %460 = vmatpush1.msra.mxu0 0.0
        %461 = vmatprep.subr.mxu0 0.0
        %462 = vmatpush1.msra.mxu0 0.0
        %463 = vmatprep.subr.mxu0 0.0
        %464 = vmatpush1.msra.mxu0 0.0
        %465 = vmatprep.subr.mxu0 0.0
        %466 = vmatpush1.msra.mxu0 0.0
        %467 = vmatprep.subr.mxu0 0.0
        %468 = vmatpush1.msra.mxu0 0.0
        %469 = vmatprep.subr.mxu0 0.0
        %470 = vmatpush1.msra.mxu0 0.0
        %471 = vmatprep.subr.mxu0 0.0
        %472 = vmatpush1.msra.mxu0 0.0
        %473 = vmatprep.subr.mxu0 0.0
        %474 = vmatpush1.msra.mxu0 0.0
        %475 = vmatprep.subr.mxu0 0.0
        %476 = vmatpush1.msra.mxu0 0.0
        %477 = vmatprep.subr.mxu0 0.0
        %478 = vmatpush1.msra.mxu0 0.0
        %479 = vmatprep.subr.mxu0 0.0
        %480 = vmatpush1.msra.mxu0 0.0
        %481 = vmatprep.subr.mxu0 0.0
        %482 = vmatpush1.msra.mxu0 0.0
        %483 = vmatprep.subr.mxu0 0.0
        %484 = vmatpush1.msra.mxu0 0.0
        %485 = vmatprep.subr.mxu0 0.0
        %486 = vmatpush1.msra.mxu0 0.0
        %487 = vmatprep.subr.mxu0 0.0
        %488 = vmatpush1.msra.mxu0 0.0
        %489 = vmatprep.subr.mxu0 0.0
        %490 = vmatpush1.msra.mxu0 0.0
        %491 = vmatprep.subr.mxu0 0.0
        %492 = vmatpush1.msra.mxu0 0.0
        %493 = vmatprep.subr.mxu0 0.0
        %494 = vmatpush1.msra.mxu0 0.0
        %495 = vmatprep.subr.mxu0 0.0
        %496 = vmatpush1.msra.mxu0 0.0
        %497 = vmatprep.subr.mxu0 0.0
        %498 = vmatpush1.msra.mxu0 0.0
        %499 = vmatprep.subr.mxu0 0.0
        %500 = vmatpush1.msra.mxu0 0.0
        %501 = vmatprep.subr.mxu0 0.0
        %502 = vmatpush1.msra.mxu0 0.0
        %503 = vmatprep.subr.mxu0 0.0
        %504 = vmatpush1.msra.mxu0 0.0
        %505 = vmatprep.subr.mxu0 0.0
        %506 = vmatpush1.msra.mxu0 0.0
        %507 = vmatprep.subr.mxu0 0.0
        %508 = vmatpush1.msra.mxu0 0.0
        %509 = vmatprep.mubr.f32.mxu0 0.0
        %510 = vmatmul.mubr.f32.gmra.mrb[0].mxu0 %v440
        %v511 = vpop.f32.mrb[0].mxu0
        %v512 = vadd.f32 %v436, %v511
        %v513 = vpop.f32.mrb[0].mxu0
        %514 = vmatprep.mubr.f32.mxu0 0.0
        %515 = vmatmul.mubr.f32.gmra.mrb[0].mxu0 %v443
        %v516 = vpop.f32.mrb[0].mxu0
        %v517 = vadd.f32 %v436, %v516
        %v518 = vpop.f32.mrb[0].mxu0
        %519 = vdwg.mxu0
        %v520 = vmax.f32 %v512, 0.0
        %v521 = vmax.f32 %v517, 0.0
        %v522 = vld [vmem:[#allocation7] sm:$0xff]
        %v523 = vld [vmem:[#allocation7 + $0x8] sm:$0xff]
        %v524 = vld [vmem:[#allocation7 + $0x10] sm:$0xff]
        %v525 = vld [vmem:[#allocation7 + $0x18] sm:$0xff]
        %v526 = vld [vmem:[#allocation7 + $0x20] sm:$0xff]
        %v527 = vld [vmem:[#allocation7 + $0x28] sm:$0xff]
        %v528 = vld [vmem:[#allocation7 + $0x30] sm:$0xff]
        %v529 = vld [vmem:[#allocation7 + $0x38] sm:$0xff]
        %v530 = vld [vmem:[%s4] sm:$0x1]
        %v532 = vlaneseq
        %v533 = vshrl.u32 %v532, 7
        %v534 = vsub.s32 0, %v533
        %v535 = vrot.slane %v530, %v534
        %vm537 = vcmask 523264
        %v539 = vsel %vm537, %v520, 0
        %v542 = vsel %vm537, %v521, 0
        %544 = vmatprep.subr.mxu0 0.0
        %545 = vmatpush1.msra.mxu0 %v522
        %546 = vmatprep.subr.mxu0 0.0
        %547 = vmatpush1.msra.mxu0 %v523
        %548 = vmatprep.subr.mxu0 0.0
        %549 = vmatpush1.msra.mxu0 %v524
        %550 = vmatprep.subr.mxu0 0.0
        %551 = vmatpush1.msra.mxu0 %v525
        %552 = vmatprep.subr.mxu0 0.0
        %553 = vmatpush1.msra.mxu0 %v526
        %554 = vmatprep.subr.mxu0 0.0
        %555 = vmatpush1.msra.mxu0 %v527
        %556 = vmatprep.subr.mxu0 0.0
        %557 = vmatpush1.msra.mxu0 %v528
        %558 = vmatprep.subr.mxu0 0.0
        %559 = vmatpush1.msra.mxu0 %v529
        %560 = vmatprep.subr.mxu0 0.0
        %561 = vmatpush1.msra.mxu0 0.0
        %562 = vmatprep.subr.mxu0 0.0
        %563 = vmatpush1.msra.mxu0 0.0
        %564 = vmatprep.subr.mxu0 0.0
        %565 = vmatpush1.msra.mxu0 0.0
        %566 = vmatprep.subr.mxu0 0.0
        %567 = vmatpush1.msra.mxu0 0.0
        %568 = vmatprep.subr.mxu0 0.0
        %569 = vmatpush1.msra.mxu0 0.0
        %570 = vmatprep.subr.mxu0 0.0
        %571 = vmatpush1.msra.mxu0 0.0
        %572 = vmatprep.subr.mxu0 0.0
        %573 = vmatpush1.msra.mxu0 0.0
        %574 = vmatprep.subr.mxu0 0.0
        %575 = vmatpush1.msra.mxu0 0.0
        %576 = vmatprep.subr.mxu0 0.0
        %577 = vmatpush1.msra.mxu0 0.0
        %578 = vmatprep.subr.mxu0 0.0
        %579 = vmatpush1.msra.mxu0 0.0
        %580 = vmatprep.subr.mxu0 0.0
        %581 = vmatpush1.msra.mxu0 0.0
        %582 = vmatprep.subr.mxu0 0.0
        %583 = vmatpush1.msra.mxu0 0.0
        %584 = vmatprep.subr.mxu0 0.0
        %585 = vmatpush1.msra.mxu0 0.0
        %586 = vmatprep.subr.mxu0 0.0
        %587 = vmatpush1.msra.mxu0 0.0
        %588 = vmatprep.subr.mxu0 0.0
        %589 = vmatpush1.msra.mxu0 0.0
        %590 = vmatprep.subr.mxu0 0.0
        %591 = vmatpush1.msra.mxu0 0.0
        %592 = vmatprep.subr.mxu0 0.0
        %593 = vmatpush1.msra.mxu0 0.0
        %594 = vmatprep.subr.mxu0 0.0
        %595 = vmatpush1.msra.mxu0 0.0
        %596 = vmatprep.subr.mxu0 0.0
        %597 = vmatpush1.msra.mxu0 0.0
        %598 = vmatprep.subr.mxu0 0.0
        %599 = vmatpush1.msra.mxu0 0.0
        %600 = vmatprep.subr.mxu0 0.0
        %601 = vmatpush1.msra.mxu0 0.0
        %602 = vmatprep.subr.mxu0 0.0
        %603 = vmatpush1.msra.mxu0 0.0
        %604 = vmatprep.subr.mxu0 0.0
        %605 = vmatpush1.msra.mxu0 0.0
        %606 = vmatprep.subr.mxu0 0.0
        %607 = vmatpush1.msra.mxu0 0.0
        %608 = vmatprep.mubr.f32.mxu0 0.0
        %609 = vmatmul.mubr.f32.gmra.mrb[0].mxu0 %v539
        %v610 = vpop.f32.mrb[0].mxu0
        %v611 = vadd.f32 %v535, %v610
        %v612 = vpop.f32.mrb[0].mxu0
        %613 = vmatprep.mubr.f32.mxu0 0.0
        %614 = vmatmul.mubr.f32.gmra.mrb[0].mxu0 %v542
        %v615 = vpop.f32.mrb[0].mxu0
        %v616 = vadd.f32 %v535, %v615
        %v617 = vpop.f32.mrb[0].mxu0
        %618 = vdwg.mxu0
        %v619 = vmin.f32 %v611, 100.0
        %v620 = vmin.f32 %v616, 100.0
        %v621 = vmul.f32 %v619, 1.442695
        %v622 = vpow.pop %v621
        %v623 = vmul.f32 %v620, 1.442695
        %v624 = vpow.pop %v623
        %v625 = vmul.f32 %v425, %v622
        %v626 = vmul.f32 %v426, %v624
        %629 = vrot.lane.b32.xlu0 %v611, 96
        %v630 = vpop.permute.xlu0 %629
        %631 = vrot.lane.b32.xlu0 %v616, 96
        %v632 = vpop.permute.xlu0 %631
        %v635 = vadd.f32 %v625, %v630
        %v636 = vadd.f32 %v626, %v632
        %v637 = vld [vmem:[#allocation8] sm:$0xff]
        %v638 = vld [vmem:[#allocation8 + $0x8] sm:$0xff]
        %v639 = vld [vmem:[#allocation8 + $0x10] sm:$0xff]
        %v640 = vld [vmem:[#allocation8 + $0x18] sm:$0xff]
        %v641 = vld [vmem:[%s6] sm:$0x1]
        %v643 = vlaneseq
        %v644 = vshrl.u32 %v643, 7
        %v645 = vsub.s32 0, %v644
        %v646 = vrot.slane %v641, %v645
        %v649 = vsel %vm438, %v635, 0
        %v652 = vsel %vm438, %v636, 0
        %654 = vmatprep.subr.mxu0 0.0
        %655 = vmatpush1.msra.mxu0 %v637
        %656 = vmatprep.subr.mxu0 0.0
        %657 = vmatpush1.msra.mxu0 %v638
        %658 = vmatprep.subr.mxu0 0.0
        %659 = vmatpush1.msra.mxu0 %v639
        %660 = vmatprep.subr.mxu0 0.0
        %661 = vmatpush1.msra.mxu0 %v640
        %662 = vmatprep.subr.mxu0 0.0
        %663 = vmatpush1.msra.mxu0 0.0
        %664 = vmatprep.subr.mxu0 0.0
        %665 = vmatpush1.msra.mxu0 0.0
        %666 = vmatprep.subr.mxu0 0.0
        %667 = vmatpush1.msra.mxu0 0.0
        %668 = vmatprep.subr.mxu0 0.0
        %669 = vmatpush1.msra.mxu0 0.0
        %670 = vmatprep.subr.mxu0 0.0
        %671 = vmatpush1.msra.mxu0 0.0
        %672 = vmatprep.subr.mxu0 0.0
        %673 = vmatpush1.msra.mxu0 0.0
        %674 = vmatprep.subr.mxu0 0.0
        %675 = vmatpush1.msra.mxu0 0.0
        %676 = vmatprep.subr.mxu0 0.0
        %677 = vmatpush1.msra.mxu0 0.0
        %678 = vmatprep.subr.mxu0 0.0
        %679 = vmatpush1.msra.mxu0 0.0
        %680 = vmatprep.subr.mxu0 0.0
        %681 = vmatpush1.msra.mxu0 0.0
        %682 = vmatprep.subr.mxu0 0.0
        %683 = vmatpush1.msra.mxu0 0.0
        %684 = vmatprep.subr.mxu0 0.0
        %685 = vmatpush1.msra.mxu0 0.0
        %686 = vmatprep.subr.mxu0 0.0
        %687 = vmatpush1.msra.mxu0 0.0
        %688 = vmatprep.subr.mxu0 0.0
        %689 = vmatpush1.msra.mxu0 0.0
        %690 = vmatprep.subr.mxu0 0.0
        %691 = vmatpush1.msra.mxu0 0.0
        %692 = vmatprep.subr.mxu0 0.0
        %693 = vmatpush1.msra.mxu0 0.0
        %694 = vmatprep.subr.mxu0 0.0
        %695 = vmatpush1.msra.mxu0 0.0
        %696 = vmatprep.subr.mxu0 0.0
        %697 = vmatpush1.msra.mxu0 0.0
        %698 = vmatprep.subr.mxu0 0.0
        %699 = vmatpush1.msra.mxu0 0.0
        %700 = vmatprep.subr.mxu0 0.0
        %701 = vmatpush1.msra.mxu0 0.0
        %702 = vmatprep.subr.mxu0 0.0
        %703 = vmatpush1.msra.mxu0 0.0
        %704 = vmatprep.subr.mxu0 0.0
        %705 = vmatpush1.msra.mxu0 0.0
        %706 = vmatprep.subr.mxu0 0.0
        %707 = vmatpush1.msra.mxu0 0.0
        %708 = vmatprep.subr.mxu0 0.0
        %709 = vmatpush1.msra.mxu0 0.0
        %710 = vmatprep.subr.mxu0 0.0
        %711 = vmatpush1.msra.mxu0 0.0
        %712 = vmatprep.subr.mxu0 0.0
        %713 = vmatpush1.msra.mxu0 0.0
        %714 = vmatprep.subr.mxu0 0.0
        %715 = vmatpush1.msra.mxu0 0.0
        %716 = vmatprep.subr.mxu0 0.0
        %717 = vmatpush1.msra.mxu0 0.0
        %718 = vmatprep.mubr.f32.mxu0 0.0
        %719 = vmatmul.mubr.f32.gmra.mrb[0].mxu0 %v649
        %v720 = vpop.f32.mrb[0].mxu0
        %v721 = vadd.f32 %v646, %v720
        %v722 = vpop.f32.mrb[0].mxu0
        %723 = vmatprep.mubr.f32.mxu0 0.0
        %724 = vmatmul.mubr.f32.gmra.mrb[0].mxu0 %v652
        %v725 = vpop.f32.mrb[0].mxu0
        %v726 = vadd.f32 %v646, %v725
        %v727 = vpop.f32.mrb[0].mxu0
        %728 = vdwg.mxu0
        %v729 = vmax.f32 %v721, 0.0
        %v730 = vmax.f32 %v726, 0.0
        %v731 = vld [vmem:[#allocation10] sm:$0xff]
        %v732 = vld [vmem:[#allocation10 + $0x8] sm:$0xff]
        %v733 = vld [vmem:[#allocation10 + $0x10] sm:$0xff]
        %v734 = vld [vmem:[#allocation10 + $0x18] sm:$0xff]
        %v735 = vld [vmem:[#allocation10 + $0x20] sm:$0xff]
        %v736 = vld [vmem:[#allocation10 + $0x28] sm:$0xff]
        %v737 = vld [vmem:[#allocation10 + $0x30] sm:$0xff]
        %v738 = vld [vmem:[#allocation10 + $0x38] sm:$0xff]
        %v739 = vld [vmem:[%s8] sm:$0x1]
        %v741 = vlaneseq
        %v742 = vshrl.u32 %v741, 7
        %v743 = vsub.s32 0, %v742
        %v744 = vrot.slane %v739, %v743
        %v747 = vsel %vm537, %v729, 0
        %v750 = vsel %vm537, %v730, 0
        %752 = vmatprep.subr.mxu0 0.0
        %753 = vmatpush1.msra.mxu0 %v731
        %754 = vmatprep.subr.mxu0 0.0
        %755 = vmatpush1.msra.mxu0 %v732
        %756 = vmatprep.subr.mxu0 0.0
        %757 = vmatpush1.msra.mxu0 %v733
        %758 = vmatprep.subr.mxu0 0.0
        %759 = vmatpush1.msra.mxu0 %v734
        %760 = vmatprep.subr.mxu0 0.0
        %761 = vmatpush1.msra.mxu0 %v735
        %762 = vmatprep.subr.mxu0 0.0
        %763 = vmatpush1.msra.mxu0 %v736
        %764 = vmatprep.subr.mxu0 0.0
        %765 = vmatpush1.msra.mxu0 %v737
        %766 = vmatprep.subr.mxu0 0.0
        %767 = vmatpush1.msra.mxu0 %v738
        %768 = vmatprep.subr.mxu0 0.0
        %769 = vmatpush1.msra.mxu0 0.0
        %770 = vmatprep.subr.mxu0 0.0
        %771 = vmatpush1.msra.mxu0 0.0
        %772 = vmatprep.subr.mxu0 0.0
        %773 = vmatpush1.msra.mxu0 0.0
        %774 = vmatprep.subr.mxu0 0.0
        %775 = vmatpush1.msra.mxu0 0.0
        %776 = vmatprep.subr.mxu0 0.0
        %777 = vmatpush1.msra.mxu0 0.0
        %778 = vmatprep.subr.mxu0 0.0
        %779 = vmatpush1.msra.mxu0 0.0
        %780 = vmatprep.subr.mxu0 0.0
        %781 = vmatpush1.msra.mxu0 0.0
        %782 = vmatprep.subr.mxu0 0.0
        %783 = vmatpush1.msra.mxu0 0.0
        %784 = vmatprep.subr.mxu0 0.0
        %785 = vmatpush1.msra.mxu0 0.0
        %786 = vmatprep.subr.mxu0 0.0
        %787 = vmatpush1.msra.mxu0 0.0
        %788 = vmatprep.subr.mxu0 0.0
        %789 = vmatpush1.msra.mxu0 0.0
        %790 = vmatprep.subr.mxu0 0.0
        %791 = vmatpush1.msra.mxu0 0.0
        %792 = vmatprep.subr.mxu0 0.0
        %793 = vmatpush1.msra.mxu0 0.0
        %794 = vmatprep.subr.mxu0 0.0
        %795 = vmatpush1.msra.mxu0 0.0
        %796 = vmatprep.subr.mxu0 0.0
        %797 = vmatpush1.msra.mxu0 0.0
        %798 = vmatprep.subr.mxu0 0.0
        %799 = vmatpush1.msra.mxu0 0.0
        %800 = vmatprep.subr.mxu0 0.0
        %801 = vmatpush1.msra.mxu0 0.0
        %802 = vmatprep.subr.mxu0 0.0
        %803 = vmatpush1.msra.mxu0 0.0
        %804 = vmatprep.subr.mxu0 0.0
        %805 = vmatpush1.msra.mxu0 0.0
        %806 = vmatprep.subr.mxu0 0.0
        %807 = vmatpush1.msra.mxu0 0.0
        %808 = vmatprep.subr.mxu0 0.0
        %809 = vmatpush1.msra.mxu0 0.0
        %810 = vmatprep.subr.mxu0 0.0
        %811 = vmatpush1.msra.mxu0 0.0
        %812 = vmatprep.subr.mxu0 0.0
        %813 = vmatpush1.msra.mxu0 0.0
        %814 = vmatprep.subr.mxu0 0.0
        %815 = vmatpush1.msra.mxu0 0.0
        %816 = vmatprep.mubr.f32.mxu0 0.0
        %817 = vmatmul.mubr.f32.gmra.mrb[0].mxu0 %v747
        %v818 = vpop.f32.mrb[0].mxu0
        %v819 = vadd.f32 %v744, %v818
        %v820 = vpop.f32.mrb[0].mxu0
        %821 = vmatprep.mubr.f32.mxu0 0.0
        %822 = vmatmul.mubr.f32.gmra.mrb[0].mxu0 %v750
        %v823 = vpop.f32.mrb[0].mxu0
        %v824 = vadd.f32 %v744, %v823
        %v825 = vpop.f32.mrb[0].mxu0
        %826 = vdwg.mxu0
        %v827 = vmin.f32 %v819, 100.0
        %v828 = vmin.f32 %v824, 100.0
        %v829 = vmul.f32 %v827, 1.442695
        %v830 = vpow.pop %v829
        %v831 = vmul.f32 %v828, 1.442695
        %v832 = vpow.pop %v831
        %v833 = vmul.f32 %v635, %v830
        %v834 = vmul.f32 %v636, %v832
        %837 = vrot.lane.b32.xlu0 %v819, 96
        %v838 = vpop.permute.xlu0 %837
        %839 = vrot.lane.b32.xlu0 %v824, 96
        %v840 = vpop.permute.xlu0 %839
        %v843 = vadd.f32 %v833, %v838
        %v844 = vadd.f32 %v834, %v840
        %845 = vst.msk [vmem:[%s414] sm:$0xff] %vm438, %v843
        %846 = vst.msk [vmem:[%s414 + $0x8] sm:$0xff] %vm438, %v844
        %s847 = sand.u32 %s230, 1
        %s848 = scalar_lea.sflag [#allocation4], %s847
        %s849 = sand.u32 %s230, 1
        %s850 = smul.addr %s849, 16
        %s851 = scalar_lea.vmem [#allocation11], %s850
        // Predicated region
        $region77: #{invertible_block_forward.1} parent=55 // pred_check
          %p852 = pneg %p240
        $region78: #{invertible_block_forward.1} parent=55 // pred_check_branch
          %854 = sbr.rel (%p852) target = $region80
        $region79: #{invertible_block_forward.1} parent=55 // pred_region
          %s855 = smul.u32 2, %s28
          %s856 = ssub.s32 3, %s855
          %p857 = scmp.lt.s32.totalorder %s856, 2
          %s858 = scalar_select %p857, %s856, 2
          %s859 = smul.u32 128, %s858
          %s861 = ssub.s32 256, %s859
          %862 = vsyncadd %s848, %s861
          %p863 = scmp.ne.s32.totalorder 0, %s859
          %s864 = smul.addr %s855, 128
          %s865 = scalar_lea.hbm %s9, %s864
          %s866 = smul.u32 8, %s858
          %s867 = sshll.u32 %s851, 4
          %s868 = int_to_ptr.vmem [resolvable:$true] %s867
          %s869 = sshll.u32 %s866, 4
          %873 = dma.vmem_to_hbm [thread:$0]  (%p863), %s868, %s869, %s865, %s848, 128, 128, 8
        $region80: #{invertible_block_forward.1} parent=55 // pred_fallthru
          _
      $region56: #{invertible_block_forward.1} parent=5 // pred_fallthru
        _
      %p874 = scmp.le.s32.totalorder 2, %s23
      // Predicated region
      $region81: #{invertible_block_forward.1} parent=5 // pred_check
        %p875 = pneg %p874
      $region82: #{invertible_block_forward.1} parent=5 // pred_check_branch
        %877 = sbr.rel (%p875) target = $region84
      $region83: #{invertible_block_forward.1} parent=5 // pred_region
        %s878 = ssub.s32 %s23, 2
        // Predicated region
        $region85: #{invertible_block_forward.1} parent=83 // pred_check
          %p879 = pneg %p246
        $region86: #{invertible_block_forward.1} parent=83 // pred_check_branch
          %881 = sbr.rel (%p879) target = $region88
        $region87: #{invertible_block_forward.1} parent=83 // pred_region
          %s882 = sand.u32 %s231, 1
          %s883 = scalar_lea.sflag [#allocation4], %s882
          %s884 = sand.u32 %s231, 1
          %s885 = smul.addr %s884, 16
          %s886 = scalar_lea.vmem [#allocation11], %s885
          %887 = dma.done %s883, 256
        $region88: #{invertible_block_forward.1} parent=83 // pred_fallthru
          _
      $region84: #{invertible_block_forward.1} parent=5 // pred_fallthru
        _
    $region6: #{invertible_block_forward.1} parent=1 // loop_footer
      %s27 = sadd.s32 1, %s23
    $region7: #{invertible_block_forward.1} parent=1 // loop_footer_branch
      %22 = sbr.rel target = $region3
    $region8: #{invertible_block_forward.1} parent=1 // loop_exit
      _
    %888 = vsyncpa [#allocation3], 1
    %s889 = scalar_lea.sflag [#allocation3], 1
    %890 = vsyncpa %s889, 1
    %891 = vsyncpa [#allocation6], 1
    %892 = vsyncpa [#allocation9], 1
    %893 = vsyncpa [#allocation4], 1
    %s894 = scalar_lea.sflag [#allocation4], 1
    %895 = vsyncpa %s894, 1

</llo_original>
